<compile_context>
chip_gen: v7x
topology: tpu7x:2x2x1
jax: 0.10.0
libtpu: 0.0.40
codegen_flags: <defaults>
</compile_context>

<pallas_src>
import jax
import jax.numpy as jnp
from jax import lax
from jax.experimental import pallas as pl
from jax.experimental.pallas import tpu as pltpu


# ----------------------------------------------------------------------------- #
# Generation-aware VMEM budgeting
# ----------------------------------------------------------------------------- #
def _vmem_capacity_bytes():
    try:
        cap = int(getattr(pltpu.get_tpu_info(), "vmem_capacity_bytes", 0))
        if cap > 0:
            return cap
    except Exception:
        pass
    return 64 * 1024 * 1024  # conservative fallback (v7x per-TC VMEM)


def _vmem_limit_bytes(vmem_cap):
    return int(vmem_cap * 0.7)


def _kernel_a_step_bytes(tile, B, C):
    """All double-buffered streams of one kernel-A grid step + in-kernel f32 temps."""
    streams = (B * C * 2      # conf (bf16)
               + B * 4        # conf_t (int32)
               + B * 2 * 2    # obj (bf16)
               + B * 8 * 2    # loc || loc_t (bf16)
               + 2 * B * 2    # lc/lo outputs (bf16)
               ) * tile
    temps = 4 * B * C * 4 * tile   # f32 upcast, exp, iota, one-hot select on conf path
    return 2 * streams + temps + 2 * 8 * 128 * 4


def _pick_tile_p(P, B, C, vmem_cap):
    """Prior-tile (multiple of 128): as large as the VMEM budget allows, prefers a
    divisor of the 128-padded prior count, keeps >= 2 grid steps when P permits."""
    p128 = -(-P // 128) * 128
    n = p128 // 128
    budget = int(vmem_cap * 0.55)
    cap_tile = 2048 if vmem_cap >= (96 << 20) else 1024
    while cap_tile > 128 and _kernel_a_step_bytes(cap_tile, B, C) > budget:
        cap_tile //= 2
    max_blocks = cap_tile // 128
    if n >= 2:
        max_blocks = min(max_blocks, max(1, n // 2))   # >= 2 grid steps
    d = 1
    for cand in range(1, max_blocks + 1):
        if n % cand == 0:
            d = cand
    if d < max(1, max_blocks // 2):     # poor divisor -> accept extra tail padding
        d = max_blocks
    d = max(1, min(d, n))
    return 128 * d


# ----------------------------------------------------------------------------- #
# Pallas kernel A: per-prior losses (prior-last, lane-dense layout, bf16 streams)
#   lc_ref (B,T) bf16 : classification CE = logsumexp(conf) - conf[conf_t]
#   lo_ref (B,T) bf16 : objectness CE     = softplus(obj[1-t] - obj[t])
#   llp_ref (1,8,128) : per-tile partial of positives-only smooth-L1 loc loss
# ----------------------------------------------------------------------------- #
def _per_prior_loss_kernel(conf_ref, conf_t_ref, obj_ref, locpair_ref,
                           lc_ref, lo_ref, llp_ref):
    conf = conf_ref[...].astype(jnp.float32)                  # (B, C, T): priors on lanes
    tgt = conf_t_ref[...]                                     # (B, T) int32
    # NOTE: pos == (conf_t > 0) exactly; the reference obj_score branch is dead.
    pos = tgt > 0

    # classification cross-entropy per prior
    m = jnp.max(conf, axis=1, keepdims=True)                  # sublane reduce
    lse = jnp.log(jnp.sum(jnp.exp(conf - m), axis=1)) + m[:, 0, :]
    cls_iota = lax.broadcasted_iota(jnp.int32, conf.shape, 1)
    picked = jnp.sum(jnp.where(cls_iota == tgt[:, None, :], conf, 0.0), axis=1)
    lc_ref[...] = (lse - picked).astype(lc_ref.dtype)

    # objectness cross-entropy per prior (2 classes -> softplus form; obj_t == pos)
    obj = obj_ref[...].astype(jnp.float32)                    # (B, 2, T)
    o0 = obj[:, 0, :]
    o1 = obj[:, 1, :]
    z = jnp.where(pos, o0 - o1, o1 - o0)                      # obj[1-t] - obj[t]
    lo_ref[...] = (jnp.maximum(z, 0.0)
                   + jnp.log(1.0 + jnp.exp(-jnp.abs(z)))).astype(lo_ref.dtype)

    # smooth-L1 localisation loss, positives-only, reduced to a per-tile partial
    lp = locpair_ref[...].astype(jnp.float32)                 # (B, 8, T): [loc_pred | loc_t]
    d = lp[:, :4, :] - lp[:, 4:, :]
    ad = jnp.abs(d)
    sl1 = jnp.where(ad < 1.0, 0.5 * d * d, ad - 0.5)
    # where (not multiply) so inf/NaN loc_t from degenerate/padded GT never leaks in
    sl1_sum = jnp.where(pos, jnp.sum(sl1, axis=1), 0.0)
    llp_ref[...] = jnp.sum(sl1_sum) + jnp.zeros(llp_ref.shape, jnp.float32)


def per_prior_losses(conf_cf, conf_t, obj_cf, locpair_cf, *, tile_p, vmem_cap):
    B, C, Pp = conf_cf.shape
    assert Pp % tile_p == 0
    grid_n = Pp // tile_p

    def chan_spec(ch):
        return pl.BlockSpec((B, ch, tile_p), lambda i: (0, 0, i))

    out_shape = (jax.ShapeDtypeStruct((B, Pp), jnp.bfloat16),
                 jax.ShapeDtypeStruct((B, Pp), jnp.bfloat16),
                 jax.ShapeDtypeStruct((grid_n, 8, 128), jnp.float32))
    out_specs = [pl.BlockSpec((B, tile_p), lambda i: (0, i)),
                 pl.BlockSpec((B, tile_p), lambda i: (0, i)),
                 pl.BlockSpec((1, 8, 128), lambda i: (i, 0, 0))]

    return pl.pallas_call(
        _per_prior_loss_kernel,
        out_shape=out_shape,
        grid_spec=pltpu.PrefetchScalarGridSpec(
            num_scalar_prefetch=0,
            grid=(grid_n,),
            in_specs=[chan_spec(C),
                      pl.BlockSpec((B, tile_p), lambda i: (0, i)),
                      chan_spec(2),
                      chan_spec(8)],
            out_specs=out_specs),
        compiler_params=pltpu.CompilerParams(
            dimension_semantics=("parallel",),          # every output block written once
            vmem_limit_bytes=_vmem_limit_bytes(vmem_cap)),
    )(conf_cf, conf_t, obj_cf, locpair_cf)


# ----------------------------------------------------------------------------- #
# Pallas kernel B: masked scalar reductions on a sublane-dense (rows, 128) view.
# Emits lane-dense per-tile partials on a "parallel" grid; final sum in XLA.
# ----------------------------------------------------------------------------- #
def _masked_sum_kernel(lc_ref, mc_ref, lo_ref, mo_ref, pc_ref, po_ref):
    lc = lc_ref[...].astype(jnp.float32)
    mc = mc_ref[...].astype(jnp.float32)
    lo = lo_ref[...].astype(jnp.float32)
    mo = mo_ref[...].astype(jnp.float32)
    pc_ref[...] = jnp.sum(lc * mc) + jnp.zeros(pc_ref.shape, jnp.float32)
    po_ref[...] = jnp.sum(lo * mo) + jnp.zeros(po_ref.shape, jnp.float32)


def masked_sums(lc_all, mask_c, lo_all, mask_o, *, vmem_cap):
    B, Pp = lc_all.shape
    total = B * Pp
    assert total % 128 == 0
    rows = total // 128

    # row tile: multiple of 8, MiB-scale steps, >= 2 grid steps when rows permit
    R = 2048 if vmem_cap >= (96 << 20) else 1024
    rows8 = -(-rows // 8) * 8
    while R > 8 and R > max(8, rows8 // 2):
        R //= 2
    R = max(8, R)
    rows_pad = -(-rows // R) * R
    grid_n = rows_pad // R

    def prep(x):
        x2 = jnp.reshape(x, (rows, 128))        # sublane-dense view (same linear order)
        if rows_pad != rows:
            x2 = jnp.pad(x2, ((0, rows_pad - rows), (0, 0)))
        return x2

    in_specs = [pl.BlockSpec((R, 128), lambda i: (i, 0)) for _ in range(4)]
    out_specs = [pl.BlockSpec((1, 8, 128), lambda i: (i, 0, 0)) for _ in range(2)]
    part = jax.ShapeDtypeStruct((grid_n, 8, 128), jnp.float32)

    pc, po = pl.pallas_call(
        _masked_sum_kernel,
        out_shape=(part, part),
        grid_spec=pltpu.PrefetchScalarGridSpec(
            num_scalar_prefetch=0,
            grid=(grid_n,),
            in_specs=in_specs,
            out_specs=out_specs),
        compiler_params=pltpu.CompilerParams(
            dimension_semantics=("parallel",),          # per-tile partials, megacore-safe
            vmem_limit_bytes=_vmem_limit_bytes(vmem_cap)),
    )(prep(lc_all), prep(mask_c), prep(lo_all), prep(mask_o))
    return jnp.sum(pc[:, 0, 0]), jnp.sum(po[:, 0, 0])


# ----------------------------------------------------------------------------- #
# Target matching (SSD box_utils.match + encode) -- plain JAX glue
# ----------------------------------------------------------------------------- #
def _point_form(priors):
    return jnp.concatenate([priors[:, :2] - priors[:, 2:] / 2.0,
                            priors[:, :2] + priors[:, 2:] / 2.0], axis=1)


def _jaccard(box_a, box_b):
    max_xy = jnp.minimum(box_a[:, None, 2:], box_b[None, :, 2:])
    min_xy = jnp.maximum(box_a[:, None, :2], box_b[None, :, :2])
    inter_wh = jnp.clip(max_xy - min_xy, 0.0)
    inter = inter_wh[..., 0] * inter_wh[..., 1]
    area_a = ((box_a[:, 2] - box_a[:, 0]) * (box_a[:, 3] - box_a[:, 1]))[:, None]
    area_b = ((box_b[:, 2] - box_b[:, 0]) * (box_b[:, 3] - box_b[:, 1]))[None, :]
    return inter / (area_a + area_b - inter)


def _match_one(threshold, truths, priors_cs, variances, labels):
    overlaps = _jaccard(truths, _point_form(priors_cs))       # (NOBJ, P)
    best_prior_idx = jnp.argmax(overlaps, axis=1)             # (NOBJ,)
    best_truth_overlap = jnp.max(overlaps, axis=0)            # (P,)
    best_truth_idx = jnp.argmax(overlaps, axis=0)             # (P,)
    best_truth_overlap = best_truth_overlap.at[best_prior_idx].set(2.0)
    # TODO(synk): torch loop resolves duplicate best_prior_idx with "last wins";
    # jnp scatter order is unspecified for duplicates (irrelevant for typical data).
    best_truth_idx = best_truth_idx.at[best_prior_idx].set(
        jnp.arange(truths.shape[0], dtype=best_truth_idx.dtype))
    matches = truths[best_truth_idx]                          # (P, 4)
    conf = labels[best_truth_idx].astype(jnp.int32) + 1
    conf = jnp.where(best_truth_overlap < threshold, 0, conf)
    g_cxcy = (matches[:, :2] + matches[:, 2:]) / 2.0 - priors_cs[:, :2]
    g_cxcy = g_cxcy / (variances[0] * priors_cs[:, 2:])
    g_wh = (matches[:, 2:] - matches[:, :2]) / priors_cs[:, 2:]
    g_wh = jnp.log(g_wh) / variances[1]
    loc = jnp.concatenate([g_cxcy, g_wh], axis=1)
    return loc, conf


def _rank_descending(loss):
    """idx_rank[b, j] = rank of prior j under descending sort of loss[b] (the torch
    double-sort, with the 2nd sort replaced by an O(P) inverse-permutation scatter)."""
    B, P = loss.shape
    order = jnp.argsort(-loss.astype(jnp.float32), axis=1)
    ranks_src = jnp.broadcast_to(jnp.arange(P, dtype=jnp.int32), (B, P))
    idx_rank = jnp.zeros((B, P), jnp.int32).at[
        jnp.arange(B, dtype=jnp.int32)[:, None], order].set(ranks_src)
    return idx_rank


def _mine(loss_all, pos_mask, negpos_ratio):
    P = loss_all.shape[1]
    mined = loss_all.astype(jnp.float32) * (1.0 - pos_mask.astype(jnp.float32))
    idx_rank = _rank_descending(mined)
    num_pos = jnp.sum(pos_mask.astype(jnp.int32), axis=1, keepdims=True)
    num_neg = jnp.minimum(negpos_ratio * num_pos, P - 1)
    neg = idx_rank < num_neg
    return neg, num_pos, num_neg


# ----------------------------------------------------------------------------- #
# RefineMultiBoxLoss forward
# ----------------------------------------------------------------------------- #
class RefineMultiBoxLossPallas:
    def __init__(self, num_classes, overlap_thresh, prior_for_matching, bkg_label,
                 neg_mining, neg_pos, neg_overlap, encode_target, obj_score,
                 tile_p=None):
        self.num_classes = num_classes
        self.threshold = overlap_thresh
        self.background_label = bkg_label
        self.encode_target = encode_target
        self.use_prior_for_matching = prior_for_matching
        self.do_neg_mining = neg_mining
        self.negpos_ratio = neg_pos
        self.neg_overlap = neg_overlap
        self.variance = [0.1, 0.2]
        self.obj_score = obj_score
        self.tile_p = tile_p                                   # None -> auto

    def __call__(self, predictions, priors, targets):
        loc_data, conf_data, obj_data = predictions
        B, P, C = conf_data.shape

        # --- matching / target encoding (per-image, JAX glue) ------------------
        # TODO(synk): padded/degenerate GT rows force-matched via best_prior_idx can put
        # -inf/NaN into loc_t for a positive prior (same behaviour as the reference).
        truths = targets[..., :4]
        labels = targets[..., 4]
        loc_t, conf_t = jax.vmap(
            lambda t, l: _match_one(self.threshold, t, priors, self.variance, l)
        )(truths, labels)
        conf_t = conf_t.astype(jnp.int32)

        # NOTE: pos == pos_obj == (conf_t > 0) exactly: the reference's obj_score
        # filter `(pos + neg_positive) > 2` is always False and its sum==0 fallback
        # restores conf_t > 0.  If that filter is ever made live, pos must again be
        # computed here from obj_data[:, :, 1] and passed to kernel A explicitly.
        pos = conf_t > 0

        # --- lane-dense (prior-last) bf16 layout + pad P to a tile multiple ----
        vmem_cap = _vmem_capacity_bytes()
        tile_p = self.tile_p or _pick_tile_p(P, B, C, vmem_cap)
        P_pad = -(-P // tile_p) * tile_p
        pad_w = P_pad - P

        def to_prior_last(x):
            # single XLA expression: bf16 cast + minor-dim transpose + pad
            return jnp.pad(jnp.transpose(x.astype(jnp.bfloat16), (0, 2, 1)),
                           ((0, 0), (0, 0), (0, pad_w)))

        conf_cf = to_prior_last(conf_data)                                  # (B, C, P_pad)
        obj_cf = to_prior_last(obj_data)                                    # (B, 2, P_pad)
        locpair_cf = to_prior_last(jnp.concatenate([loc_data, loc_t], -1))  # (B, 8, P_pad)
        conf_t_p = jnp.pad(conf_t, ((0, 0), (0, pad_w)))                    # (B, P_pad) i32

        # --- Pallas kernel A: per-prior CE + fused masked smooth-L1 partials ---
        lc_all_p, lo_all_p, ll_part = per_prior_losses(
            conf_cf, conf_t_p, obj_cf, locpair_cf, tile_p=tile_p, vmem_cap=vmem_cap)
        loss_l = jnp.sum(ll_part[:, 0, 0])

        lc_all = lc_all_p[:, :P]
        lo_all = lo_all_p[:, :P]

        # --- hard negative mining (single argsort + inverse-permutation scatter)
        # TODO(synk): the argsort has no clean Pallas TPU equivalent; kept in XLA.
        neg_c, num_pos, _ = _mine(lc_all, pos, self.negpos_ratio)
        neg_o, _, num_obj_neg = _mine(lo_all, pos, self.negpos_ratio)

        def pad_mask(m):
            return jnp.pad(m.astype(jnp.bfloat16), ((0, 0), (0, pad_w)))

        mask_c = pad_mask(jnp.logical_or(pos, neg_c))
        mask_o = pad_mask(jnp.logical_or(pos, neg_o))

        # --- Pallas kernel B: masked reductions --------------------------------
        loss_c, loss_obj = masked_sums(lc_all_p, mask_c, lo_all_p, mask_o,
                                       vmem_cap=vmem_cap)

        N = jnp.maximum(jnp.sum(num_pos).astype(jnp.float32), 1.0)
        loss_l = loss_l / N
        loss_c = loss_c / N
        N1 = jnp.maximum(jnp.sum(num_obj_neg).astype(jnp.float32), 1.0)
        loss_obj = 0.4 * (loss_obj / N1)
        return loss_l, loss_c, loss_obj


# ----------------------------------------------------------------------------- #
if __name__ == "__main__":
    key = jax.random.PRNGKey(0)
    B, P, C, NOBJ = 2, 300, 8, 3        # P not a multiple of 128 -> exercises padding path
    ks = jax.random.split(key, 8)

    loc_data = 0.1 * jax.random.normal(ks[0], (B, P, 4), jnp.float32)
    conf_data = jax.random.normal(ks[1], (B, P, C), jnp.float32)
    obj_data = jax.random.normal(ks[2], (B, P, 2), jnp.float32)

    cxcy = jax.random.uniform(ks[3], (P, 2), minval=0.1, maxval=0.9)
    wh = jax.random.uniform(ks[4], (P, 2), minval=0.1, maxval=0.4)
    priors = jnp.concatenate([cxcy, wh], axis=1).astype(jnp.float32)   # (P, 4) center-size

    xy0 = jax.random.uniform(ks[5], (B, NOBJ, 2), minval=0.05, maxval=0.55)
    bwh = jax.random.uniform(ks[6], (B, NOBJ, 2), minval=0.2, maxval=0.4)
    labels = jax.random.randint(ks[7], (B, NOBJ, 1), 0, C - 1).astype(jnp.float32)
    targets = jnp.concatenate([xy0, xy0 + bwh, labels], axis=-1)        # (B, NOBJ, 5)

    criterion = RefineMultiBoxLossPallas(
        num_classes=C, overlap_thresh=0.5, prior_for_matching=True, bkg_label=0,
        neg_mining=True, neg_pos=3, neg_overlap=0.5, encode_target=False,
        obj_score=0.01)

    loss_l, loss_c, loss_obj = criterion((loc_data, conf_data, obj_data), priors, targets)
    loss_l, loss_c, loss_obj = jax.block_until_ready((loss_l, loss_c, loss_obj))
    assert bool(jnp.isfinite(loss_l)) and bool(jnp.isfinite(loss_c)) and bool(jnp.isfinite(loss_obj))
    print("KERNEL_OK")
</pallas_src>

<mosaic_0001>
module attributes {stable_mosaic.version = 11 : i64} {
  func.func @_per_prior_loss_kernel(%arg0: i32, %arg1: memref<2x8x128xbf16, #tpu.memory_space<vmem>>, %arg2: memref<2x128xi32, #tpu.memory_space<vmem>>, %arg3: memref<2x2x128xbf16, #tpu.memory_space<vmem>>, %arg4: memref<2x8x128xbf16, #tpu.memory_space<vmem>>, %arg5: memref<2x128xbf16, #tpu.memory_space<vmem>>, %arg6: memref<2x128xbf16, #tpu.memory_space<vmem>>, %arg7: memref<1x8x128xf32, #tpu.memory_space<vmem>>) attributes {dimension_semantics = [#tpu.dimension_semantics<parallel>], iteration_bounds = array<i64: 3>, scalar_prefetch = 0 : i64, scratch_operands = 0 : i64, tpu.core_type = #tpu.core_type<tc>, window_params = [{transform_indices = @transform_0, window_bounds = array<i64: 2, 8, 128>}, {transform_indices = @transform_1, window_bounds = array<i64: 2, 128>}, {transform_indices = @transform_2, window_bounds = array<i64: 2, 2, 128>}, {transform_indices = @transform_3, window_bounds = array<i64: 2, 8, 128>}, {transform_indices = @transform_4, window_bounds = array<i64: 2, 128>}, {transform_indices = @transform_5, window_bounds = array<i64: 2, 128>}, {transform_indices = @transform_6, window_bounds = array<i64: 1, 8, 128>}]} {
    %c0 = arith.constant 0 : index
    %c0_0 = arith.constant 0 : index
    %c0_1 = arith.constant 0 : index
    %0 = vector.load %arg1[%c0, %c0_0, %c0_1] : memref<2x8x128xbf16, #tpu.memory_space<vmem>>, vector<2x8x128xbf16>
    %1 = arith.extf %0 : vector<2x8x128xbf16> to vector<2x8x128xf32>
    %c0_2 = arith.constant 0 : index
    %c0_3 = arith.constant 0 : index
    %2 = vector.load %arg2[%c0_2, %c0_3] : memref<2x128xi32, #tpu.memory_space<vmem>>, vector<2x128xi32>
    %c0_i32 = arith.constant 0 : i32
    %3 = vector.broadcast %c0_i32 : i32 to vector<2x128xi32>
    %4 = arith.cmpi sgt, %2, %3 : vector<2x128xi32>
    %cst = arith.constant dense<0xFF800000> : vector<2x128xf32>
    %5 = vector.multi_reduction <maximumf>, %1, %cst [1] : vector<2x8x128xf32> to vector<2x128xf32>
    %6 = vector.shape_cast %5 : vector<2x128xf32> to vector<2x1x128xf32>
    %7 = vector.broadcast %6 : vector<2x1x128xf32> to vector<2x8x128xf32>
    %8 = arith.subf %1, %7 : vector<2x8x128xf32>
    %9 = math.exp %8 : vector<2x8x128xf32>
    %cst_4 = arith.constant dense<0.000000e+00> : vector<2x128xf32>
    %10 = vector.multi_reduction <add>, %9, %cst_4 [1] : vector<2x8x128xf32> to vector<2x128xf32>
    %11 = math.log %10 : vector<2x128xf32>
    %12 = vector.shape_cast %6 : vector<2x1x128xf32> to vector<2x128xf32>
    %13 = arith.addf %11, %12 : vector<2x128xf32>
    %14 = tpu.iota {dimensions = array<i32: 1>} : vector<2x8x128xi32>
    %15 = vector.shape_cast %2 : vector<2x128xi32> to vector<2x1x128xi32>
    %16 = vector.broadcast %15 : vector<2x1x128xi32> to vector<2x8x128xi32>
    %17 = arith.cmpi eq, %14, %16 : vector<2x8x128xi32>
    %cst_5 = arith.constant 0.000000e+00 : f32
    %18 = vector.broadcast %cst_5 : f32 to vector<2x8x128xf32>
    %19 = arith.select %17, %1, %18 : vector<2x8x128xi1>, vector<2x8x128xf32>
    %cst_6 = arith.constant dense<0.000000e+00> : vector<2x128xf32>
    %20 = vector.multi_reduction <add>, %19, %cst_6 [1] : vector<2x8x128xf32> to vector<2x128xf32>
    %21 = arith.subf %13, %20 : vector<2x128xf32>
    %22 = arith.truncf %21 : vector<2x128xf32> to vector<2x128xbf16>
    %c0_7 = arith.constant 0 : index
    %c0_8 = arith.constant 0 : index
    %23 = vector.load %arg5[%c0_7, %c0_8] : memref<2x128xbf16, #tpu.memory_space<vmem>>, vector<2x128xbf16>
    tpu.vector_store %arg5[%c0_7, %c0_8], %22 {strides = array<i32>} : memref<2x128xbf16, #tpu.memory_space<vmem>>, vector<2x128xbf16>,
    %c0_9 = arith.constant 0 : index
    %c0_10 = arith.constant 0 : index
    %c0_11 = arith.constant 0 : index
    %24 = vector.load %arg3[%c0_9, %c0_10, %c0_11] : memref<2x2x128xbf16, #tpu.memory_space<vmem>>, vector<2x2x128xbf16>
    %25 = arith.extf %24 : vector<2x2x128xbf16> to vector<2x2x128xf32>
    %26 = vector.extract_strided_slice %25 {offsets = [0, 0, 0], sizes = [2, 1, 128], strides = [1, 1, 1]} : vector<2x2x128xf32> to vector<2x1x128xf32>
    %27 = vector.shape_cast %26 : vector<2x1x128xf32> to vector<2x128xf32>
    %28 = vector.extract_strided_slice %25 {offsets = [0, 1, 0], sizes = [2, 1, 128], strides = [1, 1, 1]} : vector<2x2x128xf32> to vector<2x1x128xf32>
    %29 = vector.shape_cast %28 : vector<2x1x128xf32> to vector<2x128xf32>
    %30 = arith.subf %27, %29 : vector<2x128xf32>
    %31 = arith.subf %29, %27 : vector<2x128xf32>
    %32 = arith.select %4, %30, %31 : vector<2x128xi1>, vector<2x128xf32>
    %cst_12 = arith.constant 0.000000e+00 : f32
    %33 = vector.broadcast %cst_12 : f32 to vector<2x128xf32>
    %34 = arith.maximumf %32, %33 : vector<2x128xf32>
    %35 = math.absf %32 : vector<2x128xf32>
    %cst_13 = arith.constant 0.000000e+00 : f32
    %36 = vector.broadcast %cst_13 : f32 to vector<2x128xf32>
    %37 = arith.subf %36, %35 : vector<2x128xf32>
    %38 = math.exp %37 : vector<2x128xf32>
    %cst_14 = arith.constant 1.000000e+00 : f32
    %39 = vector.broadcast %cst_14 : f32 to vector<2x128xf32>
    %40 = arith.addf %39, %38 : vector<2x128xf32>
    %41 = math.log %40 : vector<2x128xf32>
    %42 = arith.addf %34, %41 : vector<2x128xf32>
    %43 = arith.truncf %42 : vector<2x128xf32> to vector<2x128xbf16>
    %c0_15 = arith.constant 0 : index
    %c0_16 = arith.constant 0 : index
    %44 = vector.load %arg6[%c0_15, %c0_16] : memref<2x128xbf16, #tpu.memory_space<vmem>>, vector<2x128xbf16>
    tpu.vector_store %arg6[%c0_15, %c0_16], %43 {strides = array<i32>} : memref<2x128xbf16, #tpu.memory_space<vmem>>, vector<2x128xbf16>,
    %c0_17 = arith.constant 0 : index
    %c0_18 = arith.constant 0 : index
    %c0_19 = arith.constant 0 : index
    %45 = vector.load %arg4[%c0_17, %c0_18, %c0_19] : memref<2x8x128xbf16, #tpu.memory_space<vmem>>, vector<2x8x128xbf16>
    %46 = arith.extf %45 : vector<2x8x128xbf16> to vector<2x8x128xf32>
    %47 = vector.extract_strided_slice %46 {offsets = [0, 0, 0], sizes = [2, 4, 128], strides = [1, 1, 1]} : vector<2x8x128xf32> to vector<2x4x128xf32>
    %48 = vector.extract_strided_slice %46 {offsets = [0, 4, 0], sizes = [2, 4, 128], strides = [1, 1, 1]} : vector<2x8x128xf32> to vector<2x4x128xf32>
    %49 = arith.subf %47, %48 : vector<2x4x128xf32>
    %50 = math.absf %49 : vector<2x4x128xf32>
    %cst_20 = arith.constant 1.000000e+00 : f32
    %51 = vector.broadcast %cst_20 : f32 to vector<2x4x128xf32>
    %52 = arith.cmpf olt, %50, %51 : vector<2x4x128xf32>
    %cst_21 = arith.constant 5.000000e-01 : f32
    %53 = vector.broadcast %cst_21 : f32 to vector<2x4x128xf32>
    %54 = arith.mulf %53, %49 : vector<2x4x128xf32>
    %55 = arith.mulf %54, %49 : vector<2x4x128xf32>
    %cst_22 = arith.constant 5.000000e-01 : f32
    %56 = vector.broadcast %cst_22 : f32 to vector<2x4x128xf32>
    %57 = arith.subf %50, %56 : vector<2x4x128xf32>
    %58 = arith.select %52, %55, %57 : vector<2x4x128xi1>, vector<2x4x128xf32>
    %cst_23 = arith.constant dense<0.000000e+00> : vector<2x128xf32>
    %59 = vector.multi_reduction <add>, %58, %cst_23 [1] : vector<2x4x128xf32> to vector<2x128xf32>
    %cst_24 = arith.constant 0.000000e+00 : f32
    %60 = vector.broadcast %cst_24 : f32 to vector<2x128xf32>
    %61 = arith.select %4, %59, %60 : vector<2x128xi1>, vector<2x128xf32>
    %62 = vector.shape_cast %61 : vector<2x128xf32> to vector<1x2x128xf32>
    %cst_25 = arith.constant dense<0.000000e+00> : vector<1xf32>
    %63 = vector.multi_reduction <add>, %62, %cst_25 [1, 2] : vector<1x2x128xf32> to vector<1xf32>
    %64 = vector.shape_cast %63 : vector<1xf32> to vector<1x1x1xf32>
    %65 = vector.extract %64[0, 0, 0] : f32 from vector<1x1x1xf32>
    %cst_26 = arith.constant 0.000000e+00 : f32
    %66 = vector.broadcast %cst_26 : f32 to vector<1x8x128xf32>
    %67 = vector.broadcast %65 : f32 to vector<1x8x128xf32>
    %68 = arith.addf %67, %66 : vector<1x8x128xf32>
    %c0_27 = arith.constant 0 : index
    %c0_28 = arith.constant 0 : index
    %c0_29 = arith.constant 0 : index
    %69 = vector.load %arg7[%c0_27, %c0_28, %c0_29] : memref<1x8x128xf32, #tpu.memory_space<vmem>>, vector<1x8x128xf32>
    tpu.vector_store %arg7[%c0_27, %c0_28, %c0_29], %68 {strides = array<i32>} : memref<1x8x128xf32, #tpu.memory_space<vmem>>, vector<1x8x128xf32>,
    return
  }
  func.func @transform_0(%arg0: i32) -> (i32, i32, i32) {
    %c0_i32 = arith.constant 0 : i32
    %c0_i32_0 = arith.constant 0 : i32
    %c0_i32_1 = arith.constant 0 : i32
    return %c0_i32, %c0_i32_0, %arg0 : i32, i32, i32
  }
  func.func @transform_1(%arg0: i32) -> (i32, i32) {
    %c0_i32 = arith.constant 0 : i32
    %c0_i32_0 = arith.constant 0 : i32
    return %c0_i32, %arg0 : i32, i32
  }
  func.func @transform_2(%arg0: i32) -> (i32, i32, i32) {
    %c0_i32 = arith.constant 0 : i32
    %c0_i32_0 = arith.constant 0 : i32
    %c0_i32_1 = arith.constant 0 : i32
    return %c0_i32, %c0_i32_0, %arg0 : i32, i32, i32
  }
  func.func @transform_3(%arg0: i32) -> (i32, i32, i32) {
    %c0_i32 = arith.constant 0 : i32
    %c0_i32_0 = arith.constant 0 : i32
    %c0_i32_1 = arith.constant 0 : i32
    return %c0_i32, %c0_i32_0, %arg0 : i32, i32, i32
  }
  func.func @transform_4(%arg0: i32) -> (i32, i32) {
    %c0_i32 = arith.constant 0 : i32
    %c0_i32_0 = arith.constant 0 : i32
    return %c0_i32, %arg0 : i32, i32
  }
  func.func @transform_5(%arg0: i32) -> (i32, i32) {
    %c0_i32 = arith.constant 0 : i32
    %c0_i32_0 = arith.constant 0 : i32
    return %c0_i32, %arg0 : i32, i32
  }
  func.func @transform_6(%arg0: i32) -> (i32, i32, i32) {
    %c0_i32 = arith.constant 0 : i32
    %c0_i32_0 = arith.constant 0 : i32
    %c0_i32_1 = arith.constant 0 : i32
    return %arg0, %c0_i32, %c0_i32_0 : i32, i32, i32
  }
}

</mosaic_0001>

<llo_original>
// kernel: tpu_custom_call.1
$region0: #{tpu_custom_call.1}
  #allocation0 [shape = 'u32[]', space=smem, size = 0x4, offset = 0x4, fixed_abs, tag = 'smem constant byte address 0x4 - core index']
  #allocation1 [shape = 'u32[144,128]{1,0:T(1,128)}', space=vmem, size = 0x12000, scoped, tag = 'internal scratch']
  %s0 = inlined_call_operand.hbm [shape: bf16[2,8,384], index: 0, kind: input, shape index: {}]
  %s1 = inlined_call_operand.hbm [shape: s32[2,384], index: 1, kind: input, shape index: {}]
  %s2 = inlined_call_operand.vmem [shape: bf16[2,2,384], index: 2, kind: input, shape index: {}]
  %s3 = inlined_call_operand.hbm [shape: bf16[2,8,384], index: 3, kind: input, shape index: {}]
  %s4 = inlined_call_operand.hbm [shape: bf16[2,384], index: 4, kind: output, shape index: {0}]
  %s5 = inlined_call_operand.hbm [shape: bf16[2,384], index: 5, kind: output, shape index: {1}]
  %s6 = inlined_call_operand.hbm [shape: f32[3,8,128], index: 6, kind: output, shape index: {2}]
  %7 = xla_tuple %s4, %s5, %s6
  %s8 = sld [smem:[#allocation0]]
  $region111: #{tpu_custom_call.1} parent=0
    _
  %s10 = ssub.s32 1, %s8
  %s11 = scalar_select 0, %s10, %s8
  $region1: #{tpu_custom_call.1} parent=0
    #allocation2 [shape = 'u8[8192]{0}', space=vmem, size = 0x2000, scoped, tag = 'input window, operand 0']
    #allocation3 [shape = 's32[2]{0}', space=sflag, size = 0x8, scoped, tag = 'scoped memory for tpu_custom_call.1']
    #allocation4 [shape = 's32[2]{0}', space=sflag, size = 0x8, scoped, tag = 'scoped memory for tpu_custom_call.1']
    #allocation5 [shape = 'u8[2048]{0}', space=vmem, size = 0x800, scoped, tag = 'input window, operand 1']
    #allocation6 [shape = 's32[2]{0}', space=sflag, size = 0x8, scoped, tag = 'scoped memory for tpu_custom_call.1']
    #allocation7 [shape = 'u8[2048]{0}', space=vmem, size = 0x800, scoped, tag = 'input window, operand 2']
    #allocation8 [shape = 'u8[8192]{0}', space=vmem, size = 0x2000, scoped, tag = 'input window, operand 3']
    #allocation9 [shape = 'u8[1024]{0}', space=vmem, size = 0x400, scoped, tag = 'output window, operand 0']
    #allocation10 [shape = 'u8[1024]{0}', space=vmem, size = 0x400, scoped, tag = 'output window, operand 1']
    #allocation11 [shape = 's32[2]{0}', space=sflag, size = 0x8, scoped, tag = 'scoped memory for tpu_custom_call.1']
    #allocation12 [shape = 'u8[8192]{0}', space=vmem, size = 0x2000, scoped, tag = 'output window, operand 2']
    %12 = vsyncpa [#allocation3], 0
    %s13 = scalar_lea.sflag [#allocation3], 1
    %14 = vsyncpa %s13, 0
    %15 = vsyncpa [#allocation6], 0
    %s16 = scalar_lea.sflag [#allocation6], 1
    %17 = vsyncpa %s16, 0
    %18 = vsyncpa [#allocation4], 0
    %s19 = scalar_lea.sflag [#allocation4], 1
    %20 = vsyncpa %s19, 0
    %21 = vsyncpa [#allocation11], 0
    %s22 = scalar_lea.sflag [#allocation11], 1
    %23 = vsyncpa %s22, 0
    loop: start=0, step=1, limit=5
    $region2: #{tpu_custom_call.1} parent=1 // loop_pre_header
      _
    $region3: #{tpu_custom_call.1} parent=1 // loop_header
      %s25 = sphi 0, %s29
      %p26 = scmp.ge.s32.totalorder %s25, 5
      %s35 = sphi 0, %s37
      %s38 = sphi 0, %s35
      %s39 = sphi 0, %s38
      %s55 = sphi 0, %s39
      %s61 = sphi 0, %s63
      %s64 = sphi 0, %s61
      %s65 = sphi 0, %s64
      %s81 = sphi 0, %s65
      %s87 = sphi 0, %s89
      %s90 = sphi 0, %s87
      %s91 = sphi 0, %s90
      %s107 = sphi 0, %s91
      %s113 = sphi 0, %s115
      %s116 = sphi 0, %s113
      %s117 = sphi 0, %s116
      %s133 = sphi 0, %s117
      %s139 = sphi 0, %s141
      %s142 = sphi 0, %s139
      %s143 = sphi 0, %s142
      %s159 = sphi 0, %s143
      %s165 = sphi 0, %s167
      %s168 = sphi 0, %s165
      %s169 = sphi 0, %s168
      %s185 = sphi 0, %s169
      %s191 = sphi 0, %s193
      %s194 = sphi 0, %s191
      %s195 = sphi 0, %s194
      %s211 = sphi 0, %s195
    $region4: #{tpu_custom_call.1} parent=1 // loop_header_branch
      %28 = sbr.rel (%p26) target = $region8
    $region5: #{tpu_custom_call.1} parent=1 // loop_body
      %s30 = ssub.s32 %s25, 1
      %s31 = ssub.s32 %s25, 2
      %s32 = sadd.s32 %s25, 1
      %s33 = ssub.s32 %s25, %s32
      %p34 = scmp.eq.s32.totalorder %s33, 0
      %s36 = sadd.s32 %s35, 1
      %s37 = scalar_select %p34, %s35, %s36
      %p40 = pneg %p34
      %p41 = scmp.eq.s32.totalorder %s25, 2
      %p42 = por %p40, %p41
      %p43 = scmp.ne.s32.totalorder %s35, %s38
      %p44 = scmp.eq.s32.totalorder %s25, 0
      %p45 = por %p43, %p44
      %p46 = scmp.ne.s32.totalorder %s35, %s38
      %p47 = scmp.eq.s32.totalorder %s30, 2
      %p48 = por %p46, %p47
      %p49 = scmp.ne.s32.totalorder %s38, %s39
      %p50 = scmp.eq.s32.totalorder %s30, 0
      %p51 = por %p49, %p50
      %p52 = scmp.ne.s32.totalorder %s38, %s39
      %p53 = scmp.eq.s32.totalorder %s31, 2
      %p54 = por %p52, %p53
      %p56 = scmp.ne.s32.totalorder %s39, %s55
      %p57 = scmp.eq.s32.totalorder %s31, 0
      %p58 = por %p56, %p57
      %s59 = ssub.s32 %s25, %s32
      %p60 = scmp.eq.s32.totalorder %s59, 0
      %s62 = sadd.s32 %s61, 1
      %s63 = scalar_select %p60, %s61, %s62
      %p66 = pneg %p60
      %p67 = scmp.eq.s32.totalorder %s25, 2
      %p68 = por %p66, %p67
      %p69 = scmp.ne.s32.totalorder %s61, %s64
      %p70 = scmp.eq.s32.totalorder %s25, 0
      %p71 = por %p69, %p70
      %p72 = scmp.ne.s32.totalorder %s61, %s64
      %p73 = scmp.eq.s32.totalorder %s30, 2
      %p74 = por %p72, %p73
      %p75 = scmp.ne.s32.totalorder %s64, %s65
      %p76 = scmp.eq.s32.totalorder %s30, 0
      %p77 = por %p75, %p76
      %p78 = scmp.ne.s32.totalorder %s64, %s65
      %p79 = scmp.eq.s32.totalorder %s31, 2
      %p80 = por %p78, %p79
      %p82 = scmp.ne.s32.totalorder %s65, %s81
      %p83 = scmp.eq.s32.totalorder %s31, 0
      %p84 = por %p82, %p83
      %s85 = ssub.s32 %s25, %s32
      %p86 = scmp.eq.s32.totalorder %s85, 0
      %s88 = sadd.s32 %s87, 1
      %s89 = scalar_select %p86, %s87, %s88
      %p92 = pneg %p86
      %p93 = scmp.eq.s32.totalorder %s25, 2
      %p94 = por %p92, %p93
      %p95 = scmp.ne.s32.totalorder %s87, %s90
      %p96 = scmp.eq.s32.totalorder %s25, 0
      %p97 = por %p95, %p96
      %p98 = scmp.ne.s32.totalorder %s87, %s90
      %p99 = scmp.eq.s32.totalorder %s30, 2
      %p100 = por %p98, %p99
      %p101 = scmp.ne.s32.totalorder %s90, %s91
      %p102 = scmp.eq.s32.totalorder %s30, 0
      %p103 = por %p101, %p102
      %p104 = scmp.ne.s32.totalorder %s90, %s91
      %p105 = scmp.eq.s32.totalorder %s31, 2
      %p106 = por %p104, %p105
      %p108 = scmp.ne.s32.totalorder %s91, %s107
      %p109 = scmp.eq.s32.totalorder %s31, 0
      %p110 = por %p108, %p109
      %s111 = ssub.s32 %s25, %s32
      %p112 = scmp.eq.s32.totalorder %s111, 0
      %s114 = sadd.s32 %s113, 1
      %s115 = scalar_select %p112, %s113, %s114
      %p118 = pneg %p112
      %p119 = scmp.eq.s32.totalorder %s25, 2
      %p120 = por %p118, %p119
      %p121 = scmp.ne.s32.totalorder %s113, %s116
      %p122 = scmp.eq.s32.totalorder %s25, 0
      %p123 = por %p121, %p122
      %p124 = scmp.ne.s32.totalorder %s113, %s116
      %p125 = scmp.eq.s32.totalorder %s30, 2
      %p126 = por %p124, %p125
      %p127 = scmp.ne.s32.totalorder %s116, %s117
      %p128 = scmp.eq.s32.totalorder %s30, 0
      %p129 = por %p127, %p128
      %p130 = scmp.ne.s32.totalorder %s116, %s117
      %p131 = scmp.eq.s32.totalorder %s31, 2
      %p132 = por %p130, %p131
      %p134 = scmp.ne.s32.totalorder %s117, %s133
      %p135 = scmp.eq.s32.totalorder %s31, 0
      %p136 = por %p134, %p135
      %s137 = ssub.s32 %s25, %s32
      %p138 = scmp.eq.s32.totalorder %s137, 0
      %s140 = sadd.s32 %s139, 1
      %s141 = scalar_select %p138, %s139, %s140
      %p144 = pneg %p138
      %p145 = scmp.eq.s32.totalorder %s25, 2
      %p146 = por %p144, %p145
      %p147 = scmp.ne.s32.totalorder %s139, %s142
      %p148 = scmp.eq.s32.totalorder %s25, 0
      %p149 = por %p147, %p148
      %p150 = scmp.ne.s32.totalorder %s139, %s142
      %p151 = scmp.eq.s32.totalorder %s30, 2
      %p152 = por %p150, %p151
      %p153 = scmp.ne.s32.totalorder %s142, %s143
      %p154 = scmp.eq.s32.totalorder %s30, 0
      %p155 = por %p153, %p154
      %p156 = scmp.ne.s32.totalorder %s142, %s143
      %p157 = scmp.eq.s32.totalorder %s31, 2
      %p158 = por %p156, %p157
      %p160 = scmp.ne.s32.totalorder %s143, %s159
      %p161 = scmp.eq.s32.totalorder %s31, 0
      %p162 = por %p160, %p161
      %s163 = ssub.s32 %s25, %s32
      %p164 = scmp.eq.s32.totalorder %s163, 0
      %s166 = sadd.s32 %s165, 1
      %s167 = scalar_select %p164, %s165, %s166
      %p170 = pneg %p164
      %p171 = scmp.eq.s32.totalorder %s25, 2
      %p172 = por %p170, %p171
      %p173 = scmp.ne.s32.totalorder %s165, %s168
      %p174 = scmp.eq.s32.totalorder %s25, 0
      %p175 = por %p173, %p174
      %p176 = scmp.ne.s32.totalorder %s165, %s168
      %p177 = scmp.eq.s32.totalorder %s30, 2
      %p178 = por %p176, %p177
      %p179 = scmp.ne.s32.totalorder %s168, %s169
      %p180 = scmp.eq.s32.totalorder %s30, 0
      %p181 = por %p179, %p180
      %p182 = scmp.ne.s32.totalorder %s168, %s169
      %p183 = scmp.eq.s32.totalorder %s31, 2
      %p184 = por %p182, %p183
      %p186 = scmp.ne.s32.totalorder %s169, %s185
      %p187 = scmp.eq.s32.totalorder %s31, 0
      %p188 = por %p186, %p187
      %s189 = ssub.s32 %s25, %s32
      %p190 = scmp.eq.s32.totalorder %s189, 0
      %s192 = sadd.s32 %s191, 1
      %s193 = scalar_select %p190, %s191, %s192
      %p196 = pneg %p190
      %p197 = scmp.eq.s32.totalorder %s25, 2
      %p198 = por %p196, %p197
      %p199 = scmp.ne.s32.totalorder %s191, %s194
      %p200 = scmp.eq.s32.totalorder %s25, 0
      %p201 = por %p199, %p200
      %p202 = scmp.ne.s32.totalorder %s191, %s194
      %p203 = scmp.eq.s32.totalorder %s30, 2
      %p204 = por %p202, %p203
      %p205 = scmp.ne.s32.totalorder %s194, %s195
      %p206 = scmp.eq.s32.totalorder %s30, 0
      %p207 = por %p205, %p206
      %p208 = scmp.ne.s32.totalorder %s194, %s195
      %p209 = scmp.eq.s32.totalorder %s31, 2
      %p210 = por %p208, %p209
      %p212 = scmp.ne.s32.totalorder %s195, %s211
      %p213 = scmp.eq.s32.totalorder %s31, 0
      %p214 = por %p212, %p213
      %p215 = scmp.le.s32.totalorder 1, %s25
      %p216 = scmp.lt.s32.totalorder %s25, 4
      %p217 = pnand %p215, %p216
      %p218 = pneg %p217
      // Predicated region
      $region9: #{tpu_custom_call.1} parent=5 // pred_check
        _
      $region10: #{tpu_custom_call.1} parent=5 // pred_check_branch
        %220 = sbr.rel (%p217) target = $region12
      $region11: #{tpu_custom_call.1} parent=5 // pred_region
        %s221 = ssub.s32 %s25, 1
      $region12: #{tpu_custom_call.1} parent=5 // pred_fallthru
        _
      %p222 = scmp.lt.s32.totalorder %s25, 3
      // Predicated region
      $region13: #{tpu_custom_call.1} parent=5 // pred_check
        %p223 = pneg %p222
      $region14: #{tpu_custom_call.1} parent=5 // pred_check_branch
        %225 = sbr.rel (%p223) target = $region16
      $region15: #{tpu_custom_call.1} parent=5 // pred_region
        // Predicated region
        $region17: #{tpu_custom_call.1} parent=15 // pred_check
          %p226 = pneg %p45
        $region18: #{tpu_custom_call.1} parent=15 // pred_check_branch
          %228 = sbr.rel (%p226) target = $region20
        $region19: #{tpu_custom_call.1} parent=15 // pred_region
          %s229 = sand.u32 %s35, 1
          %s230 = scalar_lea.sflag [#allocation3], %s229
          %s231 = sand.u32 %s35, 1
          %s232 = smul.addr %s231, 8
          %s233 = scalar_lea.vmem [#allocation2], %s232
          %s235 = ssub.s32 128, 128
          %236 = vsyncadd %s230, %s235
          %s237 = smul.addr %s25, 64
          %s238 = scalar_lea.hbm %s0, %s237
          %s239 = sshll.u32 %s233, 4
          %s240 = int_to_ptr.vmem [resolvable:$true] %s239
          %245 = dma.hbm_to_vmem [thread:$0]  %s238, 128, %s240, %s230, 192, 64, 4
        $region20: #{tpu_custom_call.1} parent=15 // pred_fallthru
          _
        // Predicated region
        $region21: #{tpu_custom_call.1} parent=15 // pred_check
          %p246 = pneg %p71
        $region22: #{tpu_custom_call.1} parent=15 // pred_check_branch
          %248 = sbr.rel (%p246) target = $region24
        $region23: #{tpu_custom_call.1} parent=15 // pred_region
          %s249 = sand.u32 %s25, 1
          %s250 = scalar_lea.sflag [#allocation6], %s249
          %s251 = sand.u32 %s61, 1
          %s252 = smul.addr %s251, 2
          %s253 = scalar_lea.vmem [#allocation5], %s252
          %s255 = ssub.s32 32, 32
          %256 = vsyncadd %s250, %s255
          %s257 = smul.addr %s25, 32
          %s258 = scalar_lea.hbm %s1, %s257
          %s260 = sshll.u32 %s253, 4
          %s261 = int_to_ptr.vmem [resolvable:$true] %s260
          %263 = dma.hbm_to_vmem [thread:$0]  %s258, 32, %s261, %s250
        $region24: #{tpu_custom_call.1} parent=15 // pred_fallthru
          _
        // Predicated region
        $region25: #{tpu_custom_call.1} parent=15 // pred_check
          %p264 = pneg %p97
        $region26: #{tpu_custom_call.1} parent=15 // pred_check_branch
          %266 = sbr.rel (%p264) target = $region28
        $region27: #{tpu_custom_call.1} parent=15 // pred_region
          %s267 = sand.u32 %s87, 1
          %s268 = sand.u32 %s87, 1
          %s269 = smul.addr %s268, 2
          %s270 = scalar_lea.vmem [#allocation7], %s269
          %s271 = scalar_lea.vmem %s2, %s25
          // Predicated region
          $region29: #{tpu_custom_call.1} parent=27 // pred_check
            _
          $region30: #{tpu_custom_call.1} parent=27 // pred_check_branch
            %273 = sbr.rel (0) target = $region32
          $region31: #{tpu_custom_call.1} parent=27 // pred_region
            // Predicated region
            $region33: #{tpu_custom_call.1} parent=31 // pred_check
              _
            $region34: #{tpu_custom_call.1} parent=31 // pred_check_branch
              %275 = sbr.rel target = $region36
            $region35: #{tpu_custom_call.1} parent=31 // pred_region
              // Predicated region
              $region48: #{tpu_custom_call.1} parent=35 // pred_check
                _
              $region49: #{tpu_custom_call.1} parent=35 // pred_check_branch
                %292 = sbr.rel (0) target = $region51
              $region50: #{tpu_custom_call.1} parent=35 // pred_region
                loop: start=0, step=1, limit=1
                $region52: #{tpu_custom_call.1} parent=50 // loop_pre_header
                  _
                $region53: #{tpu_custom_call.1} parent=50 // loop_header
                  %s295 = sphi 0, %s299
                  %p296 = scmp.ge.s32.totalorder %s295, 1
                  %s300 = sphi %s271, %s271
                  %s301 = sphi %s270, %s270
                $region54: #{tpu_custom_call.1} parent=50 // loop_header_branch
                  %298 = sbr.rel (%p296) target = $region58
                $region55: #{tpu_custom_call.1} parent=50 // loop_body
                  %v302 = vld [vmem:[%s300] sm:$0x1]
                  %303 = vst [vmem:[%s301] sm:$0x1] %v302
                  %v304 = vld [vmem:[%s300 + $0x3] sm:$0x1]
                  %305 = vst [vmem:[%s301 + $0x1] sm:$0x1] %v304
                $region56: #{tpu_custom_call.1} parent=50 // loop_footer
                  %s299 = sadd.s32 1, %s295
                $region57: #{tpu_custom_call.1} parent=50 // loop_footer_branch
                  %294 = sbr.rel target = $region53
                $region58: #{tpu_custom_call.1} parent=50 // loop_exit
                  _
              $region51: #{tpu_custom_call.1} parent=35 // pred_fallthru
                _
            $region36: #{tpu_custom_call.1} parent=31 // pred_fallthru
              _
            // Predicated region
            $region37: #{tpu_custom_call.1} parent=31 // pred_check
              _
            $region38: #{tpu_custom_call.1} parent=31 // pred_check_branch
              %277 = sbr.rel (0) target = $region40
            $region39: #{tpu_custom_call.1} parent=31 // pred_region
              loop: start=0, step=1, limit=1
              $region41: #{tpu_custom_call.1} parent=39 // loop_pre_header
                _
              $region42: #{tpu_custom_call.1} parent=39 // loop_header
                %s280 = sphi 0, %s284
                %p281 = scmp.ge.s32.totalorder %s280, 1
                %s285 = sphi %s271, %s271
                %s286 = sphi %s270, %s270
              $region43: #{tpu_custom_call.1} parent=39 // loop_header_branch
                %283 = sbr.rel (%p281) target = $region47
              $region44: #{tpu_custom_call.1} parent=39 // loop_body
                %v287 = vld [vmem:[%s285] sm:$0x1]
                %288 = vst [vmem:[%s286] sm:$0x1] %v287
                %v289 = vld [vmem:[%s285 + $0x3] sm:$0x1]
                %290 = vst [vmem:[%s286 + $0x1] sm:$0x1] %v289
              $region45: #{tpu_custom_call.1} parent=39 // loop_footer
                %s284 = sadd.s32 1, %s280
              $region46: #{tpu_custom_call.1} parent=39 // loop_footer_branch
                %279 = sbr.rel target = $region42
              $region47: #{tpu_custom_call.1} parent=39 // loop_exit
                _
            $region40: #{tpu_custom_call.1} parent=31 // pred_fallthru
              _
          $region32: #{tpu_custom_call.1} parent=27 // pred_fallthru
            _
          %306 = vnop
        $region28: #{tpu_custom_call.1} parent=15 // pred_fallthru
          _
        // Predicated region
        $region59: #{tpu_custom_call.1} parent=15 // pred_check
          %p307 = pneg %p123
        $region60: #{tpu_custom_call.1} parent=15 // pred_check_branch
          %309 = sbr.rel (%p307) target = $region62
        $region61: #{tpu_custom_call.1} parent=15 // pred_region
          %s310 = sand.u32 %s25, 1
          %s311 = scalar_lea.sflag [#allocation6], %s310
          %s312 = sand.u32 %s113, 1
          %s313 = smul.addr %s312, 8
          %s314 = scalar_lea.vmem [#allocation8], %s313
          %s316 = ssub.s32 128, 128
          %317 = vsyncadd %s311, %s316
          %s318 = smul.addr %s25, 64
          %s319 = scalar_lea.hbm %s3, %s318
          %s320 = sshll.u32 %s314, 4
          %s321 = int_to_ptr.vmem [resolvable:$true] %s320
          %326 = dma.hbm_to_vmem [thread:$0]  %s319, 128, %s321, %s311, 192, 64, 4
        $region62: #{tpu_custom_call.1} parent=15 // pred_fallthru
          _
      $region16: #{tpu_custom_call.1} parent=5 // pred_fallthru
        _
      %p327 = scmp.le.s32.totalorder 1, %s25
      %p328 = scmp.lt.s32.totalorder %s25, 4
      %p329 = pnand %p327, %p328
      %p330 = pneg %p329
      // Predicated region
      $region63: #{tpu_custom_call.1} parent=5 // pred_check
        _
      $region64: #{tpu_custom_call.1} parent=5 // pred_check_branch
        %332 = sbr.rel (%p329) target = $region66
      $region65: #{tpu_custom_call.1} parent=5 // pred_region
        %s333 = ssub.s32 %s25, 1
        %s334 = sand.u32 %s38, 1
        %s335 = scalar_lea.sflag [#allocation3], %s334
        %s336 = sand.u32 %s38, 1
        %s337 = smul.addr %s336, 8
        %s338 = scalar_lea.vmem [#allocation2], %s337
        // Predicated region
        $region67: #{tpu_custom_call.1} parent=65 // pred_check
          %p339 = pneg %p51
        $region68: #{tpu_custom_call.1} parent=65 // pred_check_branch
          %341 = sbr.rel (%p339) target = $region70
        $region69: #{tpu_custom_call.1} parent=65 // pred_region
          %342 = dma.done %s335, 128
        $region70: #{tpu_custom_call.1} parent=65 // pred_fallthru
          _
        %s343 = sand.u32 %s30, 1
        %s344 = scalar_lea.sflag [#allocation6], %s343
        %s345 = sand.u32 %s64, 1
        %s346 = smul.addr %s345, 2
        %s347 = scalar_lea.vmem [#allocation5], %s346
        // Predicated region
        $region71: #{tpu_custom_call.1} parent=65 // pred_check
          %p348 = pneg %p77
        $region72: #{tpu_custom_call.1} parent=65 // pred_check_branch
          %350 = sbr.rel (%p348) target = $region74
        $region73: #{tpu_custom_call.1} parent=65 // pred_region
          %351 = dma.done %s344, 32
        $region74: #{tpu_custom_call.1} parent=65 // pred_fallthru
          _
        %s352 = sand.u32 %s90, 1
        %s353 = sand.u32 %s90, 1
        %s354 = smul.addr %s353, 2
        %s355 = scalar_lea.vmem [#allocation7], %s354
        // Predicated region
        $region75: #{tpu_custom_call.1} parent=65 // pred_check
          %p356 = pneg %p103
        $region76: #{tpu_custom_call.1} parent=65 // pred_check_branch
          %358 = sbr.rel (%p356) target = $region78
        $region77: #{tpu_custom_call.1} parent=65 // pred_region
          _
        $region78: #{tpu_custom_call.1} parent=65 // pred_fallthru
          _
        %s359 = sand.u32 %s30, 1
        %s360 = scalar_lea.sflag [#allocation6], %s359
        %s361 = sand.u32 %s116, 1
        %s362 = smul.addr %s361, 8
        %s363 = scalar_lea.vmem [#allocation8], %s362
        // Predicated region
        $region79: #{tpu_custom_call.1} parent=65 // pred_check
          %p364 = pneg %p129
        $region80: #{tpu_custom_call.1} parent=65 // pred_check_branch
          %366 = sbr.rel (%p364) target = $region82
        $region81: #{tpu_custom_call.1} parent=65 // pred_region
          %367 = dma.done %s360, 128
        $region82: #{tpu_custom_call.1} parent=65 // pred_fallthru
          _
        %s368 = sand.u32 %s38, 1
        %s369 = scalar_lea.sflag [#allocation3], %s368
        %s370 = sand.u32 %s38, 1
        %s371 = smul.addr %s370, 8
        %s372 = scalar_lea.vmem [#allocation2], %s371
        %p373 = pneg %p51
        %p374 = pneg %p48
        %s375 = sand.u32 %s30, 1
        %s376 = scalar_lea.sflag [#allocation6], %s375
        %s377 = sand.u32 %s64, 1
        %s378 = smul.addr %s377, 2
        %s379 = scalar_lea.vmem [#allocation5], %s378
        %p380 = pneg %p77
        %p381 = pneg %p74
        %s382 = sand.u32 %s90, 1
        %s383 = sand.u32 %s90, 1
        %s384 = smul.addr %s383, 2
        %s385 = scalar_lea.vmem [#allocation7], %s384
        %p386 = pneg %p103
        %p387 = pneg %p100
        %s388 = sand.u32 %s30, 1
        %s389 = scalar_lea.sflag [#allocation6], %s388
        %s390 = sand.u32 %s116, 1
        %s391 = smul.addr %s390, 8
        %s392 = scalar_lea.vmem [#allocation8], %s391
        %p393 = pneg %p129
        %p394 = pneg %p126
        %p395 = pneg %p155
        %p396 = pneg %p152
        %s397 = sand.u32 %s142, 1
        %s398 = scalar_lea.sflag [#allocation4], %s397
        %s399 = sand.u32 %s142, 1
        %s400 = scalar_lea.vmem [#allocation9], %s399
        %p401 = pneg %p181
        %p402 = pneg %p178
        %s403 = sand.u32 %s30, 1
        %s404 = scalar_lea.sflag [#allocation11], %s403
        %s405 = sand.u32 %s168, 1
        %s406 = scalar_lea.vmem [#allocation10], %s405
        %p407 = pneg %p207
        %p408 = pneg %p204
        %s409 = sand.u32 %s30, 1
        %s410 = scalar_lea.sflag [#allocation11], %s409
        %s411 = sand.u32 %s194, 1
        %s412 = smul.addr %s411, 8
        %s413 = scalar_lea.vmem [#allocation12], %s412
        %v414 = vld [vmem:[%s338] sm:$0xf]
        %v415 = vld [vmem:[%s338 + $0x4] sm:$0xf]
        %v416 = vunpack.c.l.bf16 %v414
        %v417 = vunpack.c.l.bf16 %v415
        %v418 = vld [vmem:[%s347] sm:$0x3]
        %vm419 = vcmp.gt.s32.totalorder %v418, 0
        %v420 = vrot.slane %v416, 4
        %v421 = vmax.f32 %v416, %v420
        %v422 = vrot.slane %v421, 2
        %v423 = vmax.f32 %v421, %v422
        %v424 = vrot.slane %v423, 1
        %v425 = vmax.f32 %v423, %v424
        %v426 = vrot.slane %v417, 4
        %v427 = vmax.f32 %v417, %v426
        %v428 = vrot.slane %v427, 2
        %v429 = vmax.f32 %v427, %v428
        %v430 = vrot.slane %v429, 1
        %v431 = vmax.f32 %v429, %v430
        %v432 = vsub.f32 %v416, %v425
        %v433 = vsub.f32 %v417, %v431
        %v434 = vmul.f32 %v432, 1.442695
        %v435 = vpow.pop %v434
        %v436 = vmul.f32 %v433, 1.442695
        %v437 = vpow.pop %v436
        %v438 = vrot.slane %v435, 4
        %v439 = vadd.f32 %v435, %v438
        %v440 = vrot.slane %v439, 2
        %v441 = vadd.f32 %v439, %v440
        %v442 = vrot.slane %v441, 1
        %v443 = vadd.f32 %v441, %v442
        %v444 = vrot.slane %v437, 4
        %v445 = vadd.f32 %v437, %v444
        %v446 = vrot.slane %v445, 2
        %v447 = vadd.f32 %v445, %v446
        %v448 = vrot.slane %v447, 1
        %v449 = vadd.f32 %v447, %v448
        %v450 = vlog2.pop %v443
        %v451 = vmul.f32 %v450, 0.6931472
        %v452 = vlog2.pop %v449
        %v453 = vmul.f32 %v452, 0.6931472
        %v454 = vadd.f32 %v451, %v425
        %v455 = vadd.f32 %v453, %v431
        %v456 = vlaneseq
        %v457 = vshrl.u32 %v456, 7
        %v459 = vunpack.c.l.s4 1966171168
        %v460 = vunpack.c.0.s8 %v459
        %v461 = vlaneseq
        %v462 = vshrl.u32 %v461, 7
        %v463 = vsub.s32 %v460, %v462
        %v464 = vrot.slane %v418, %v463
        %v465 = vcombine.high %v464, %v464
        %v467 = vunpack.c.l.s4 1966171168
        %v468 = vunpack.c.0.s8 %v467
        %v469 = vlaneseq
        %v470 = vshrl.u32 %v469, 7
        %v471 = vsub.s32 %v468, %v470
        %v472 = vrot.slane %v464, %v471
        %v474 = vunpack.c.l.s4 1966171168
        %v475 = vunpack.c.0.s8 %v474
        %v476 = vlaneseq
        %v477 = vshrl.u32 %v476, 7
        %v478 = vsub.s32 %v475, %v477
        %v479 = vrot.slane %v465, %v478
        %v480 = vlaneseq
        %v481 = vshrl.u32 %v480, 7
        %v482 = vsub.s32 0, %v481
        %v483 = vrot.slane %v472, %v482
        %v484 = vlaneseq
        %v485 = vshrl.u32 %v484, 7
        %v486 = vsub.s32 0, %v485
        %v487 = vrot.slane %v479, %v486
        %vm488 = vcmp.eq.s32.totalorder %v457, %v483
        %vm489 = vcmp.eq.s32.totalorder %v457, %v487
        %v490 = vsel %vm488, %v416, 0.0
        %v491 = vsel %vm489, %v417, 0.0
        %v492 = vrot.slane %v490, 4
        %v493 = vadd.f32 %v490, %v492
        %v494 = vrot.slane %v493, 2
        %v495 = vadd.f32 %v493, %v494
        %v496 = vrot.slane %v495, 1
        %v497 = vadd.f32 %v495, %v496
        %v498 = vrot.slane %v491, 4
        %v499 = vadd.f32 %v491, %v498
        %v500 = vrot.slane %v499, 2
        %v501 = vadd.f32 %v499, %v500
        %v502 = vrot.slane %v501, 1
        %v503 = vadd.f32 %v501, %v502
        %v504 = vsub.f32 %v454, %v497
        %v505 = vsub.f32 %v455, %v503
        %v506 = vpack.c.bf16 %v504, %v504
        %v507 = vpack.c.bf16 %v505, %v505
        %v511 = vunpack.c.l.s4 1966171168
        %v512 = vunpack.c.0.s8 %v511
        %v513 = vlaneseq
        %v514 = vshrl.u32 %v513, 7
        %v515 = vsub.s32 %v512, %v514
        %v516 = vrot.slane %v506, %v515
        %v518 = vunpack.c.l.s4 1966171168
        %v519 = vunpack.c.0.s8 %v518
        %v520 = vlaneseq
        %v521 = vshrl.u32 %v520, 7
        %v522 = vsub.s32 %v519, %v521
        %v523 = vrot.slane %v516, %v522
        %v525 = vunpack.c.l.s4 1966171168
        %v526 = vunpack.c.0.s8 %v525
        %v527 = vlaneseq
        %v528 = vshrl.u32 %v527, 7
        %v529 = vsub.s32 %v526, %v528
        %v530 = vrot.slane %v507, %v529
        %v532 = vunpack.c.l.s4 1966171168
        %v533 = vunpack.c.0.s8 %v532
        %v534 = vlaneseq
        %v535 = vshrl.u32 %v534, 7
        %v536 = vsub.s32 %v533, %v535
        %v537 = vrot.slane %v530, %v536
        %v539 = vunpack.c.l.s4 1935823168
        %v540 = vunpack.c.0.s8 %v539
        %v541 = vlaneseq
        %v542 = vshrl.u32 %v541, 7
        %v543 = vsub.s32 %v540, %v542
        %v544 = vrot.slane %v523, %v543
        %v546 = vunpack.c.l.s4 1935823168
        %v547 = vunpack.c.0.s8 %v546
        %v548 = vlaneseq
        %v549 = vshrl.u32 %v548, 7
        %v550 = vsub.s32 %v547, %v549
        %v551 = vrot.slane %v544, %v550
        %v553 = vunpack.c.l.s4 1935823168
        %v554 = vunpack.c.0.s8 %v553
        %v555 = vlaneseq
        %v556 = vshrl.u32 %v555, 7
        %v557 = vsub.s32 %v554, %v556
        %v558 = vrot.slane %v537, %v557
        %v560 = vunpack.c.l.s4 1935823168
        %v561 = vunpack.c.0.s8 %v560
        %v562 = vlaneseq
        %v563 = vshrl.u32 %v562, 7
        %v564 = vsub.s32 %v561, %v563
        %v565 = vrot.slane %v558, %v564
        %v566 = vunpack.c.l.b16 %v551
        %v567 = vunpack.c.l.b16 %v565
        %v568 = vrot.slane %v567, 7
        %vm569 = vcmask 1041409
        %v570 = vsel %vm569, %v568, %v566
        %v571 = vpack.c.b16 %v570, %v570
        %v573 = vunpack.c.l.s4 1966171168
        %v574 = vunpack.c.0.s8 %v573
        %v575 = vlaneseq
        %v576 = vshrl.u32 %v575, 7
        %v577 = vsub.s32 %v574, %v576
        %v578 = vrot.slane %v571, %v577
        %v580 = vunpack.c.l.s4 1966171168
        %v581 = vunpack.c.0.s8 %v580
        %v582 = vlaneseq
        %v583 = vshrl.u32 %v582, 7
        %v584 = vsub.s32 %v581, %v583
        %v585 = vrot.slane %v578, %v584
        %587 = vst [vmem:[%s400] sm:$0x1] %v585
        %v588 = vld [vmem:[%s355] sm:$0x1]
        %v589 = vld [vmem:[%s355 + $0x1] sm:$0x1]
        %v590 = vunpack.c.l.bf16 %v588
        %v591 = vunpack.c.l.bf16 %v589
        %v594 = vrot.slane %v590, 7
        %v595 = vrot.slane %v594, 2
        %v596 = vrot.slane %v591, 7
        %v597 = vrot.slane %v596, 2
        %v600 = vsub.f32 %v590, %v595
        %v601 = vsub.f32 %v591, %v597
        %v604 = vsub.f32 %v590, %v594
        %v605 = vsub.f32 %v591, %v596
        %v608 = vlaneseq
        %v609 = vshrl.u32 %v608, 7
        %v610 = vsub.s32 0, %v609
        %v611 = vrot.slane %v600, %v610
        %v612 = vlaneseq
        %v613 = vshrl.u32 %v612, 7
        %v614 = vsub.s32 0, %v613
        %v615 = vrot.slane %v601, %v614
        %v616 = vsel %vm569, %v615, %v611
        %v620 = vlaneseq
        %v621 = vshrl.u32 %v620, 7
        %v622 = vsub.s32 1, %v621
        %v623 = vrot.slane %v604, %v622
        %v624 = vlaneseq
        %v625 = vshrl.u32 %v624, 7
        %v626 = vsub.s32 1, %v625
        %v627 = vrot.slane %v605, %v626
        %v628 = vsel %vm569, %v627, %v623
        %v630 = vsel %vm419, %v616, %v628
        %v631 = vmax.f32 %v630, 0.0
        %v632 = vand.u32 2147483647, %v630
        %v633 = vsub.f32 0.0, %v632
        %v634 = vmul.f32 %v633, 1.442695
        %v635 = vpow.pop %v634
        %v636 = vadd.f32 %v635, 1.0
        %v637 = vlog2.pop %v636
        %v638 = vmul.f32 %v637, 0.6931472
        %v639 = vadd.f32 %v631, %v638
        %v640 = vpack.c.bf16 %v639, %v639
        %641 = vst [vmem:[%s406] sm:$0x1] %v640
        %v642 = vld [vmem:[%s363] sm:$0xf]
        %v643 = vld [vmem:[%s363 + $0x4] sm:$0xf]
        %v644 = vunpack.c.l.bf16 %v642
        %v645 = vunpack.c.l.bf16 %v643
        %v648 = vrot.slane %v644, 4
        %v649 = vrot.slane %v645, 4
        %v652 = vsub.f32 %v644, %v648
        %v653 = vsub.f32 %v645, %v649
        %v654 = vand.u32 2147483647, %v652
        %v655 = vand.u32 2147483647, %v653
        %vm656 = vcmp.lt.f32.partialorder %v654, 1.0
        %vm657 = vcmp.lt.f32.partialorder %v655, 1.0
        %v658 = vmul.f32 %v652, 0.5
        %v659 = vmul.f32 %v653, 0.5
        %v660 = vmul.f32 %v658, %v652
        %v661 = vmul.f32 %v659, %v653
        %v662 = vsub.f32 %v654, 0.5
        %v663 = vsub.f32 %v655, 0.5
        %v664 = vsel %vm656, %v660, %v662
        %v665 = vsel %vm657, %v661, %v663
        %vm666 = vcmask 1043456
        %v667 = vsel %vm666, %v664, 0.0
        %v668 = vrot.slane %v667, 4
        %v669 = vadd.f32 %v667, %v668
        %v670 = vrot.slane %v669, 2
        %v671 = vadd.f32 %v669, %v670
        %v672 = vrot.slane %v671, 1
        %v673 = vadd.f32 %v671, %v672
        %v674 = vsel %vm666, %v665, 0.0
        %v675 = vrot.slane %v674, 4
        %v676 = vadd.f32 %v674, %v675
        %v677 = vrot.slane %v676, 2
        %v678 = vadd.f32 %v676, %v677
        %v679 = vrot.slane %v678, 1
        %v680 = vadd.f32 %v678, %v679
        %v683 = vsel %vm569, %v680, %v673
        %v685 = vsel %vm419, %v683, 0.0
        %vm686 = vcmask 1041408
        %v687 = vsel %vm686, %v685, 0.0
        %688 = vadd.xlane.f32.xlu0 %v687
        %v689 = vpop.xlane.xlu0 %688
        %v690 = vrot.slane %v689, 4
        %v691 = vadd.f32 %v689, %v690
        %v692 = vrot.slane %v691, 2
        %v693 = vadd.f32 %v691, %v692
        %v694 = vrot.slane %v693, 1
        %v695 = vadd.f32 %v693, %v694
        %s696 = vtos %v695
        %v697 = vstv %s696
        %v698 = vadd.f32 %v697, 0.0
        %699 = vst [vmem:[%s413] sm:$0xff] %v698
        %s700 = sand.u32 %s142, 1
        %s701 = scalar_lea.sflag [#allocation4], %s700
        %s702 = sand.u32 %s142, 1
        %s703 = scalar_lea.vmem [#allocation9], %s702
        %s704 = sand.u32 %s30, 1
        %s705 = scalar_lea.sflag [#allocation11], %s704
        %s706 = sand.u32 %s168, 1
        %s707 = scalar_lea.vmem [#allocation10], %s706
        %s708 = sand.u32 %s30, 1
        %s709 = scalar_lea.sflag [#allocation11], %s708
        %s710 = sand.u32 %s194, 1
        %s711 = smul.addr %s710, 8
        %s712 = scalar_lea.vmem [#allocation12], %s711
        // Predicated region
        $region83: #{tpu_custom_call.1} parent=65 // pred_check
          %p713 = pneg %p152
        $region84: #{tpu_custom_call.1} parent=65 // pred_check_branch
          %715 = sbr.rel (%p713) target = $region86
        $region85: #{tpu_custom_call.1} parent=65 // pred_region
          %s717 = ssub.s32 16, 16
          %718 = vsyncadd %s701, %s717
          %s719 = smul.addr %s30, 16
          %s720 = scalar_lea.hbm %s4, %s719
          %s722 = sshll.u32 %s703, 4
          %s723 = int_to_ptr.vmem [resolvable:$true] %s722
          %725 = dma.vmem_to_hbm [thread:$0]  %s723, 16, %s720, %s701
        $region86: #{tpu_custom_call.1} parent=65 // pred_fallthru
          _
        // Predicated region
        $region87: #{tpu_custom_call.1} parent=65 // pred_check
          %p726 = pneg %p178
        $region88: #{tpu_custom_call.1} parent=65 // pred_check_branch
          %728 = sbr.rel (%p726) target = $region90
        $region89: #{tpu_custom_call.1} parent=65 // pred_region
          %s730 = ssub.s32 16, 16
          %731 = vsyncadd %s705, %s730
          %s732 = smul.addr %s30, 16
          %s733 = scalar_lea.hbm %s5, %s732
          %s735 = sshll.u32 %s707, 4
          %s736 = int_to_ptr.vmem [resolvable:$true] %s735
          %738 = dma.vmem_to_hbm [thread:$0]  %s736, 16, %s733, %s705
        $region90: #{tpu_custom_call.1} parent=65 // pred_fallthru
          _
        // Predicated region
        $region91: #{tpu_custom_call.1} parent=65 // pred_check
          %p739 = pneg %p204
        $region92: #{tpu_custom_call.1} parent=65 // pred_check_branch
          %741 = sbr.rel (%p739) target = $region94
        $region93: #{tpu_custom_call.1} parent=65 // pred_region
          %s743 = ssub.s32 128, 128
          %744 = vsyncadd %s709, %s743
          %s745 = smul.addr %s30, 128
          %s746 = scalar_lea.hbm %s6, %s745
          %s748 = sshll.u32 %s712, 4
          %s749 = int_to_ptr.vmem [resolvable:$true] %s748
          %751 = dma.vmem_to_hbm [thread:$0]  %s749, 128, %s746, %s709
        $region94: #{tpu_custom_call.1} parent=65 // pred_fallthru
          _
      $region66: #{tpu_custom_call.1} parent=5 // pred_fallthru
        _
      %p752 = scmp.le.s32.totalorder 2, %s25
      // Predicated region
      $region95: #{tpu_custom_call.1} parent=5 // pred_check
        %p753 = pneg %p752
      $region96: #{tpu_custom_call.1} parent=5 // pred_check_branch
        %755 = sbr.rel (%p753) target = $region98
      $region97: #{tpu_custom_call.1} parent=5 // pred_region
        %s756 = ssub.s32 %s25, 2
        // Predicated region
        $region99: #{tpu_custom_call.1} parent=97 // pred_check
          %p757 = pneg %p158
        $region100: #{tpu_custom_call.1} parent=97 // pred_check_branch
          %759 = sbr.rel (%p757) target = $region102
        $region101: #{tpu_custom_call.1} parent=97 // pred_region
          %s760 = sand.u32 %s143, 1
          %s761 = scalar_lea.sflag [#allocation4], %s760
          %s762 = sand.u32 %s143, 1
          %s763 = scalar_lea.vmem [#allocation9], %s762
          %764 = dma.done %s761, 16
        $region102: #{tpu_custom_call.1} parent=97 // pred_fallthru
          _
        // Predicated region
        $region103: #{tpu_custom_call.1} parent=97 // pred_check
          %p765 = pneg %p184
        $region104: #{tpu_custom_call.1} parent=97 // pred_check_branch
          %767 = sbr.rel (%p765) target = $region106
        $region105: #{tpu_custom_call.1} parent=97 // pred_region
          %s768 = sand.u32 %s31, 1
          %s769 = scalar_lea.sflag [#allocation11], %s768
          %s770 = sand.u32 %s169, 1
          %s771 = scalar_lea.vmem [#allocation10], %s770
          %772 = dma.done %s769, 16
        $region106: #{tpu_custom_call.1} parent=97 // pred_fallthru
          _
        // Predicated region
        $region107: #{tpu_custom_call.1} parent=97 // pred_check
          %p773 = pneg %p210
        $region108: #{tpu_custom_call.1} parent=97 // pred_check_branch
          %775 = sbr.rel (%p773) target = $region110
        $region109: #{tpu_custom_call.1} parent=97 // pred_region
          %s776 = sand.u32 %s31, 1
          %s777 = scalar_lea.sflag [#allocation11], %s776
          %s778 = sand.u32 %s195, 1
          %s779 = smul.addr %s778, 8
          %s780 = scalar_lea.vmem [#allocation12], %s779
          %781 = dma.done %s777, 128
        $region110: #{tpu_custom_call.1} parent=97 // pred_fallthru
          _
      $region98: #{tpu_custom_call.1} parent=5 // pred_fallthru
        _
    $region6: #{tpu_custom_call.1} parent=1 // loop_footer
      %s29 = sadd.s32 1, %s25
    $region7: #{tpu_custom_call.1} parent=1 // loop_footer_branch
      %24 = sbr.rel target = $region3
    $region8: #{tpu_custom_call.1} parent=1 // loop_exit
      _
    %782 = vsyncpa [#allocation3], 1
    %s783 = scalar_lea.sflag [#allocation3], 1
    %784 = vsyncpa %s783, 1
    %785 = vsyncpa [#allocation6], 1
    %s786 = scalar_lea.sflag [#allocation6], 1
    %787 = vsyncpa %s786, 1
    %788 = vsyncpa [#allocation4], 1
    %s789 = scalar_lea.sflag [#allocation4], 1
    %790 = vsyncpa %s789, 1
    %791 = vsyncpa [#allocation11], 1
    %s792 = scalar_lea.sflag [#allocation11], 1
    %793 = vsyncpa %s792, 1

</llo_original>
